<compile_context>
chip_gen: v5e
topology: v5e:2x2
jax: 0.10.0
libtpu: 0.0.40
codegen_flags: <defaults>
</compile_context>

<pallas_src>
import math
import jax
import jax.numpy as jnp
from jax.experimental import pallas as pl
from jax.experimental.pallas import tpu as pltpu


_EPS = 1e-5                       # nn.LayerNorm default eps
_INV_SQRT2 = 1.0 / math.sqrt(2.0)


def _round_up(x, m):
    return ((x + m - 1) // m) * m


def _layernorm(x, gamma, beta):
    mu = jnp.mean(x, axis=-1, keepdims=True)
    var = jnp.mean((x - mu) * (x - mu), axis=-1, keepdims=True)
    xn = (x - mu) * jax.lax.rsqrt(var + _EPS)
    return xn * gamma + beta


def _gelu_exact(x):
    # PyTorch nn.GELU() default = exact erf form.
    return 0.5 * x * (1.0 + jax.lax.erf(x * _INV_SQRT2))


def film_fusion_kernel(hg_ref, hc_ref, gn_ref, bn_ref,
                       wgb_ref, wp1_ref, wp2_ref,
                       g2_ref, b2_ref, o_ref):
    f32 = jnp.float32
    d = hg_ref.shape[-1]

    hg = hg_ref[...].astype(f32)          # (bm, d)
    hc = hc_ref[...].astype(f32)          # (bm, d)
    gn = gn_ref[...].astype(f32)          # (1, d)
    bn = bn_ref[...].astype(f32)          # (1, d)

    # Shared pre-norm on both streams.
    hcn = _layernorm(hc, gn, bn)
    hgn = _layernorm(hg, gn, bn)

    # FiLM parameters: single fused Linear d -> 2d, split into gamma / beta
    # by a lane-aligned slice of the f32 MXU result (d is a multiple of 128).
    wdt = wgb_ref.dtype
    gb = jnp.dot(hcn.astype(wdt), wgb_ref[...], preferred_element_type=f32)  # (bm, 2d)
    gamma = gb[:, :d]
    beta = gb[:, d:]
    h_mod = gamma * hgn + beta

    # proj = GELU -> (dropout: identity in eval) -> Linear(2d, 2d, no bias).
    # GELU([hcn ‖ h_mod]) @ Wp  ==  GELU(hcn) @ Wp[:d] + GELU(h_mod) @ Wp[d:]
    a_c = _gelu_exact(hcn)
    a_m = _gelu_exact(h_mod)
    y = (jnp.dot(a_c.astype(wdt), wp1_ref[...], preferred_element_type=f32)
         + jnp.dot(a_m.astype(wdt), wp2_ref[...], preferred_element_type=f32))

    # Post-fusion LayerNorm over 2d.
    g2 = g2_ref[...].astype(f32)
    b2 = b2_ref[...].astype(f32)
    o_ref[...] = _layernorm(y, g2, b2).astype(o_ref.dtype)


def film_fusion(h_g, h_c, params, *, block_rows=256):
    """Pallas implementation of FiLMFusion.forward (inference).

    h_g, h_c: (..., d) arrays (d must be a multiple of 128).
    params: dict with
      'gn','bn'     : (d,)    shared LayerNorm affine
      'w_gb'        : (d, 2d) gamma_beta Linear weight, (in, out) layout
      'wp1','wp2'   : (d, 2d) row-halves of the 2d->2d proj Linear, (in, out)
      'g2','b2'     : (2d,)   post-fusion LayerNorm affine
    Returns (..., 2d).
    """
    lead = h_g.shape[:-1]
    d = h_g.shape[-1]
    assert h_c.shape == h_g.shape
    assert d % 128 == 0, "per-modality dim d must be a multiple of 128"
    D = 2 * d

    h_g = h_g.reshape(-1, d)
    h_c = h_c.reshape(-1, d)
    B = h_g.shape[0]

    act_dt = jnp.result_type(h_g.dtype, h_c.dtype)
    row_mult = 16 if jnp.dtype(act_dt).itemsize <= 2 else 8
    bm = min(_round_up(block_rows, row_mult), _round_up(B, row_mult))
    Bp = _round_up(B, bm)
    if Bp != B:                       # ragged batch -> zero-pad rows
        h_g = jnp.pad(h_g, ((0, Bp - B), (0, 0)))
        h_c = jnp.pad(h_c, ((0, Bp - B), (0, 0)))

    gn = params["gn"].reshape(1, d)
    bn = params["bn"].reshape(1, d)
    g2 = params["g2"].reshape(1, D)
    b2 = params["b2"].reshape(1, D)
    wgb = params["w_gb"]
    wp1, wp2 = params["wp1"], params["wp2"]

    grid = (Bp // bm,)
    in_row = pl.BlockSpec((bm, d), lambda i: (i, 0))
    vec_d = pl.BlockSpec((1, d), lambda i: (0, 0))
    vec_D = pl.BlockSpec((1, D), lambda i: (0, 0))
    mat_dD = pl.BlockSpec((d, D), lambda i: (0, 0))
    out_row = pl.BlockSpec((bm, D), lambda i: (i, 0))

    w_isz = jnp.dtype(wgb.dtype).itemsize
    a_isz = jnp.dtype(act_dt).itemsize
    weight_bytes = 3 * d * D * w_isz        # W_gb + two halves of W_p

    # VMEM budget: double-buffered row tiles + resident weights + f32
    # intermediates, with slack.  Capped at 64 MiB (v7x physical VMEM).
    vmem_est = (2 * 2 * bm * d * a_isz      # h_g / h_c row tiles, double-buffered
                + 2 * bm * D * a_isz        # output tile, double-buffered
                + 2 * weight_bytes
                + 8 * bm * D * 4            # f32 intermediates headroom
                + (4 << 20))
    vmem_limit = int(min(max(vmem_est, 32 << 20), 64 << 20))

    cost = pl.CostEstimate(
        flops=int(12 * Bp * d * d),                 # gamma/beta (4Bd^2) + proj (8Bd^2)
        transcendentals=int(Bp * D),                # erf over the 2d GELU inputs
        bytes_accessed=int(Bp * 2 * d * a_isz + Bp * D * a_isz
                           + weight_bytes + (2 * d + 2 * D) * 4),
    )

    out = pl.pallas_call(
        film_fusion_kernel,
        out_shape=jax.ShapeDtypeStruct((Bp, D), act_dt),
        grid_spec=pltpu.PrefetchScalarGridSpec(
            num_scalar_prefetch=0,
            grid=grid,
            in_specs=[in_row, in_row, vec_d, vec_d,
                      mat_dD, mat_dD, mat_dD,
                      vec_D, vec_D],
            out_specs=out_row,
        ),
        compiler_params=pltpu.CompilerParams(
            dimension_semantics=("parallel",),
            vmem_limit_bytes=vmem_limit),
        cost_estimate=cost,
    )(h_g, h_c, gn, bn, wgb, wp1, wp2, g2, b2)

    if Bp != B:
        out = out[:B]
    return out.reshape(*lead, D)


def init_params(d, key, dtype=jnp.float32):
    """Deterministic parameter init matching FiLMFusion(d).

    PyTorch stores Linear weights as (out, in); here they are kept transposed
    as (in, out):
      gamma_beta.weight (2d, d)  ->  w_gb = W.T               (d, 2d)
      proj Linear (2d, 2d)       ->  wp1 = W.T[:d], wp2 = W.T[d:]
    """
    D = 2 * d
    k1, k2 = jax.random.split(key)
    b1 = 1.0 / math.sqrt(d)   # nn.Linear(d, 2d) uniform bound
    b2 = 1.0 / math.sqrt(D)   # nn.Linear(2d, 2d) uniform bound
    w_gb = jax.random.uniform(k1, (d, D), jnp.float32, -b1, b1)   # (in, out)
    w_p = jax.random.uniform(k2, (D, D), jnp.float32, -b2, b2)    # (in, out)
    return {
        "gn": jnp.ones((d,), dtype),
        "bn": jnp.zeros((d,), dtype),
        "w_gb": w_gb.astype(dtype),
        "wp1": w_p[:d, :].astype(dtype),
        "wp2": w_p[d:, :].astype(dtype),
        "g2": jnp.ones((D,), dtype),
        "b2": jnp.zeros((D,), dtype),
    }


def _reference(h_g, h_c, params):
    """Pure-JAX mirror of FiLMFusion.forward (eval mode)."""
    d = h_g.shape[-1]

    def ln(v, g, b):
        mu = jnp.mean(v, -1, keepdims=True)
        var = jnp.mean((v - mu) ** 2, -1, keepdims=True)
        return (v - mu) / jnp.sqrt(var + _EPS) * g + b

    hc = ln(h_c, params["gn"], params["bn"])
    hg = ln(h_g, params["gn"], params["bn"])
    gb = hc @ params["w_gb"]
    gamma, beta = gb[:, :d], gb[:, d:]
    h_mod = gamma * hg + beta
    cat = jnp.concatenate([hc, h_mod], axis=-1)
    act = 0.5 * cat * (1.0 + jax.lax.erf(cat * _INV_SQRT2))
    w_p = jnp.concatenate([params["wp1"], params["wp2"]], axis=0)
    y = act @ w_p
    return ln(y, params["g2"], params["b2"])


if __name__ == "__main__":
    d = 128      # per-modality hidden (lane-aligned); output dim = 2d = 256
    B = 8        # batch
    key = jax.random.PRNGKey(0)
    kg, kc, kp = jax.random.split(key, 3)

    h_g = jax.random.normal(kg, (B, d), jnp.float32)
    h_c = jax.random.normal(kc, (B, d), jnp.float32)
    params = init_params(d, kp)

    out = film_fusion(h_g, h_c, params)
    out = jax.block_until_ready(out)

    ref = _reference(h_g, h_c, params)
    assert out.shape == (B, 2 * d)
    assert jnp.allclose(out, ref, atol=1e-4, rtol=1e-4), "mismatch vs reference"

    print("KERNEL_OK")
</pallas_src>

<mosaic_0001>
module attributes {stable_mosaic.version = 11 : i64} {
  func.func @film_fusion_kernel(%arg0: i32, %arg1: memref<8x128xf32, #tpu.memory_space<vmem>>, %arg2: memref<8x128xf32, #tpu.memory_space<vmem>>, %arg3: memref<1x128xf32, #tpu.memory_space<vmem>>, %arg4: memref<1x128xf32, #tpu.memory_space<vmem>>, %arg5: memref<128x256xf32, #tpu.memory_space<vmem>>, %arg6: memref<128x256xf32, #tpu.memory_space<vmem>>, %arg7: memref<128x256xf32, #tpu.memory_space<vmem>>, %arg8: memref<1x256xf32, #tpu.memory_space<vmem>>, %arg9: memref<1x256xf32, #tpu.memory_space<vmem>>, %arg10: memref<8x256xf32, #tpu.memory_space<vmem>>) attributes {dimension_semantics = [#tpu.dimension_semantics<parallel>], iteration_bounds = array<i64: 1>, scalar_prefetch = 0 : i64, scratch_operands = 0 : i64, tpu.core_type = #tpu.core_type<tc>, window_params = [{transform_indices = @transform_0, window_bounds = array<i64: 8, 128>}, {transform_indices = @transform_1, window_bounds = array<i64: 8, 128>}, {pipeline_mode = #tpu.pipeline_mode<synchronous>, transform_indices = @transform_2, window_bounds = array<i64: 1, 128>}, {pipeline_mode = #tpu.pipeline_mode<synchronous>, transform_indices = @transform_3, window_bounds = array<i64: 1, 128>}, {pipeline_mode = #tpu.pipeline_mode<synchronous>, transform_indices = @transform_4, window_bounds = array<i64: 128, 256>}, {pipeline_mode = #tpu.pipeline_mode<synchronous>, transform_indices = @transform_5, window_bounds = array<i64: 128, 256>}, {pipeline_mode = #tpu.pipeline_mode<synchronous>, transform_indices = @transform_6, window_bounds = array<i64: 128, 256>}, {pipeline_mode = #tpu.pipeline_mode<synchronous>, transform_indices = @transform_7, window_bounds = array<i64: 1, 256>}, {pipeline_mode = #tpu.pipeline_mode<synchronous>, transform_indices = @transform_8, window_bounds = array<i64: 1, 256>}, {transform_indices = @transform_9, window_bounds = array<i64: 8, 256>}]} {
    %c0 = arith.constant 0 : index
    %c0_0 = arith.constant 0 : index
    %0 = vector.load %arg1[%c0, %c0_0] : memref<8x128xf32, #tpu.memory_space<vmem>>, vector<8x128xf32>
    %c0_1 = arith.constant 0 : index
    %c0_2 = arith.constant 0 : index
    %1 = vector.load %arg2[%c0_1, %c0_2] : memref<8x128xf32, #tpu.memory_space<vmem>>, vector<8x128xf32>
    %c0_3 = arith.constant 0 : index
    %c0_4 = arith.constant 0 : index
    %2 = vector.load %arg3[%c0_3, %c0_4] : memref<1x128xf32, #tpu.memory_space<vmem>>, vector<1x128xf32>
    %c0_5 = arith.constant 0 : index
    %c0_6 = arith.constant 0 : index
    %3 = vector.load %arg4[%c0_5, %c0_6] : memref<1x128xf32, #tpu.memory_space<vmem>>, vector<1x128xf32>
    %cst = arith.constant dense<0.000000e+00> : vector<8xf32>
    %4 = vector.multi_reduction <add>, %1, %cst [1] : vector<8x128xf32> to vector<8xf32>
    %5 = vector.shape_cast %4 : vector<8xf32> to vector<8x1xf32>
    %cst_7 = arith.constant 1.280000e+02 : f32
    %6 = vector.broadcast %cst_7 : f32 to vector<8x1xf32>
    %7 = arith.divf %5, %6 : vector<8x1xf32>
    %8 = vector.broadcast %7 : vector<8x1xf32> to vector<8x128xf32>
    %9 = arith.subf %1, %8 : vector<8x128xf32>
    %10 = vector.broadcast %7 : vector<8x1xf32> to vector<8x128xf32>
    %11 = arith.subf %1, %10 : vector<8x128xf32>
    %12 = arith.mulf %9, %11 : vector<8x128xf32>
    %cst_8 = arith.constant dense<0.000000e+00> : vector<8xf32>
    %13 = vector.multi_reduction <add>, %12, %cst_8 [1] : vector<8x128xf32> to vector<8xf32>
    %14 = vector.shape_cast %13 : vector<8xf32> to vector<8x1xf32>
    %cst_9 = arith.constant 1.280000e+02 : f32
    %15 = vector.broadcast %cst_9 : f32 to vector<8x1xf32>
    %16 = arith.divf %14, %15 : vector<8x1xf32>
    %17 = vector.broadcast %7 : vector<8x1xf32> to vector<8x128xf32>
    %18 = arith.subf %1, %17 : vector<8x128xf32>
    %cst_10 = arith.constant 9.99999974E-6 : f32
    %19 = vector.broadcast %cst_10 : f32 to vector<8x1xf32>
    %20 = arith.addf %16, %19 : vector<8x1xf32>
    %21 = math.rsqrt %20 : vector<8x1xf32>
    %22 = vector.broadcast %21 : vector<8x1xf32> to vector<8x128xf32>
    %23 = arith.mulf %18, %22 : vector<8x128xf32>
    %24 = vector.broadcast %2 : vector<1x128xf32> to vector<8x128xf32>
    %25 = arith.mulf %23, %24 : vector<8x128xf32>
    %26 = vector.broadcast %3 : vector<1x128xf32> to vector<8x128xf32>
    %27 = arith.addf %25, %26 : vector<8x128xf32>
    %cst_11 = arith.constant dense<0.000000e+00> : vector<8xf32>
    %28 = vector.multi_reduction <add>, %0, %cst_11 [1] : vector<8x128xf32> to vector<8xf32>
    %29 = vector.shape_cast %28 : vector<8xf32> to vector<8x1xf32>
    %cst_12 = arith.constant 1.280000e+02 : f32
    %30 = vector.broadcast %cst_12 : f32 to vector<8x1xf32>
    %31 = arith.divf %29, %30 : vector<8x1xf32>
    %32 = vector.broadcast %31 : vector<8x1xf32> to vector<8x128xf32>
    %33 = arith.subf %0, %32 : vector<8x128xf32>
    %34 = vector.broadcast %31 : vector<8x1xf32> to vector<8x128xf32>
    %35 = arith.subf %0, %34 : vector<8x128xf32>
    %36 = arith.mulf %33, %35 : vector<8x128xf32>
    %cst_13 = arith.constant dense<0.000000e+00> : vector<8xf32>
    %37 = vector.multi_reduction <add>, %36, %cst_13 [1] : vector<8x128xf32> to vector<8xf32>
    %38 = vector.shape_cast %37 : vector<8xf32> to vector<8x1xf32>
    %cst_14 = arith.constant 1.280000e+02 : f32
    %39 = vector.broadcast %cst_14 : f32 to vector<8x1xf32>
    %40 = arith.divf %38, %39 : vector<8x1xf32>
    %41 = vector.broadcast %31 : vector<8x1xf32> to vector<8x128xf32>
    %42 = arith.subf %0, %41 : vector<8x128xf32>
    %cst_15 = arith.constant 9.99999974E-6 : f32
    %43 = vector.broadcast %cst_15 : f32 to vector<8x1xf32>
    %44 = arith.addf %40, %43 : vector<8x1xf32>
    %45 = math.rsqrt %44 : vector<8x1xf32>
    %46 = vector.broadcast %45 : vector<8x1xf32> to vector<8x128xf32>
    %47 = arith.mulf %42, %46 : vector<8x128xf32>
    %48 = vector.broadcast %2 : vector<1x128xf32> to vector<8x128xf32>
    %49 = arith.mulf %47, %48 : vector<8x128xf32>
    %50 = vector.broadcast %3 : vector<1x128xf32> to vector<8x128xf32>
    %51 = arith.addf %49, %50 : vector<8x128xf32>
    %c0_16 = arith.constant 0 : index
    %c0_17 = arith.constant 0 : index
    %52 = vector.load %arg5[%c0_16, %c0_17] : memref<128x256xf32, #tpu.memory_space<vmem>>, vector<128x256xf32>
    %cst_18 = arith.constant dense<0.000000e+00> : vector<8x256xf32>
    %53 = tpu.matmul %27, %52, %cst_18 {dimension_numbers = #tpu.dot_dimension_numbers<[1], [0], [0], [1], [0, 0, 1, 1], [], []>} : vector<8x128xf32>, vector<128x256xf32>, vector<8x256xf32> -> vector<8x256xf32>
    %54 = vector.extract_strided_slice %53 {offsets = [0, 0], sizes = [8, 128], strides = [1, 1]} : vector<8x256xf32> to vector<8x128xf32>
    %55 = vector.extract_strided_slice %53 {offsets = [0, 128], sizes = [8, 128], strides = [1, 1]} : vector<8x256xf32> to vector<8x128xf32>
    %56 = arith.mulf %54, %51 : vector<8x128xf32>
    %57 = arith.addf %56, %55 : vector<8x128xf32>
    %cst_19 = arith.constant 5.000000e-01 : f32
    %58 = vector.broadcast %cst_19 : f32 to vector<8x128xf32>
    %59 = arith.mulf %58, %27 : vector<8x128xf32>
    %cst_20 = arith.constant 0.707106769 : f32
    %60 = vector.broadcast %cst_20 : f32 to vector<8x128xf32>
    %61 = arith.mulf %27, %60 : vector<8x128xf32>
    %62 = math.erf %61 : vector<8x128xf32>
    %cst_21 = arith.constant 1.000000e+00 : f32
    %63 = vector.broadcast %cst_21 : f32 to vector<8x128xf32>
    %64 = arith.addf %63, %62 : vector<8x128xf32>
    %65 = arith.mulf %59, %64 : vector<8x128xf32>
    %cst_22 = arith.constant 5.000000e-01 : f32
    %66 = vector.broadcast %cst_22 : f32 to vector<8x128xf32>
    %67 = arith.mulf %66, %57 : vector<8x128xf32>
    %cst_23 = arith.constant 0.707106769 : f32
    %68 = vector.broadcast %cst_23 : f32 to vector<8x128xf32>
    %69 = arith.mulf %57, %68 : vector<8x128xf32>
    %70 = math.erf %69 : vector<8x128xf32>
    %cst_24 = arith.constant 1.000000e+00 : f32
    %71 = vector.broadcast %cst_24 : f32 to vector<8x128xf32>
    %72 = arith.addf %71, %70 : vector<8x128xf32>
    %73 = arith.mulf %67, %72 : vector<8x128xf32>
    %c0_25 = arith.constant 0 : index
    %c0_26 = arith.constant 0 : index
    %74 = vector.load %arg6[%c0_25, %c0_26] : memref<128x256xf32, #tpu.memory_space<vmem>>, vector<128x256xf32>
    %cst_27 = arith.constant dense<0.000000e+00> : vector<8x256xf32>
    %75 = tpu.matmul %65, %74, %cst_27 {dimension_numbers = #tpu.dot_dimension_numbers<[1], [0], [0], [1], [0, 0, 1, 1], [], []>} : vector<8x128xf32>, vector<128x256xf32>, vector<8x256xf32> -> vector<8x256xf32>
    %c0_28 = arith.constant 0 : index
    %c0_29 = arith.constant 0 : index
    %76 = vector.load %arg7[%c0_28, %c0_29] : memref<128x256xf32, #tpu.memory_space<vmem>>, vector<128x256xf32>
    %cst_30 = arith.constant dense<0.000000e+00> : vector<8x256xf32>
    %77 = tpu.matmul %73, %76, %cst_30 {dimension_numbers = #tpu.dot_dimension_numbers<[1], [0], [0], [1], [0, 0, 1, 1], [], []>} : vector<8x128xf32>, vector<128x256xf32>, vector<8x256xf32> -> vector<8x256xf32>
    %78 = arith.addf %75, %77 : vector<8x256xf32>
    %c0_31 = arith.constant 0 : index
    %c0_32 = arith.constant 0 : index
    %79 = vector.load %arg8[%c0_31, %c0_32] : memref<1x256xf32, #tpu.memory_space<vmem>>, vector<1x256xf32>
    %c0_33 = arith.constant 0 : index
    %c0_34 = arith.constant 0 : index
    %80 = vector.load %arg9[%c0_33, %c0_34] : memref<1x256xf32, #tpu.memory_space<vmem>>, vector<1x256xf32>
    %cst_35 = arith.constant dense<0.000000e+00> : vector<8xf32>
    %81 = vector.multi_reduction <add>, %78, %cst_35 [1] : vector<8x256xf32> to vector<8xf32>
    %82 = vector.shape_cast %81 : vector<8xf32> to vector<8x1xf32>
    %cst_36 = arith.constant 2.560000e+02 : f32
    %83 = vector.broadcast %cst_36 : f32 to vector<8x1xf32>
    %84 = arith.divf %82, %83 : vector<8x1xf32>
    %85 = vector.broadcast %84 : vector<8x1xf32> to vector<8x256xf32>
    %86 = arith.subf %78, %85 : vector<8x256xf32>
    %87 = vector.broadcast %84 : vector<8x1xf32> to vector<8x256xf32>
    %88 = arith.subf %78, %87 : vector<8x256xf32>
    %89 = arith.mulf %86, %88 : vector<8x256xf32>
    %cst_37 = arith.constant dense<0.000000e+00> : vector<8xf32>
    %90 = vector.multi_reduction <add>, %89, %cst_37 [1] : vector<8x256xf32> to vector<8xf32>
    %91 = vector.shape_cast %90 : vector<8xf32> to vector<8x1xf32>
    %cst_38 = arith.constant 2.560000e+02 : f32
    %92 = vector.broadcast %cst_38 : f32 to vector<8x1xf32>
    %93 = arith.divf %91, %92 : vector<8x1xf32>
    %94 = vector.broadcast %84 : vector<8x1xf32> to vector<8x256xf32>
    %95 = arith.subf %78, %94 : vector<8x256xf32>
    %cst_39 = arith.constant 9.99999974E-6 : f32
    %96 = vector.broadcast %cst_39 : f32 to vector<8x1xf32>
    %97 = arith.addf %93, %96 : vector<8x1xf32>
    %98 = math.rsqrt %97 : vector<8x1xf32>
    %99 = vector.broadcast %98 : vector<8x1xf32> to vector<8x256xf32>
    %100 = arith.mulf %95, %99 : vector<8x256xf32>
    %101 = vector.broadcast %79 : vector<1x256xf32> to vector<8x256xf32>
    %102 = arith.mulf %100, %101 : vector<8x256xf32>
    %103 = vector.broadcast %80 : vector<1x256xf32> to vector<8x256xf32>
    %104 = arith.addf %102, %103 : vector<8x256xf32>
    %c0_40 = arith.constant 0 : index
    %c0_41 = arith.constant 0 : index
    %105 = vector.load %arg10[%c0_40, %c0_41] : memref<8x256xf32, #tpu.memory_space<vmem>>, vector<8x256xf32>
    tpu.vector_store %arg10[%c0_40, %c0_41], %104 {strides = array<i32>} : memref<8x256xf32, #tpu.memory_space<vmem>>, vector<8x256xf32>,
    return
  }
  func.func @transform_0(%arg0: i32) -> (i32, i32) {
    %c0_i32 = arith.constant 0 : i32
    %c0_i32_0 = arith.constant 0 : i32
    return %arg0, %c0_i32 : i32, i32
  }
  func.func @transform_1(%arg0: i32) -> (i32, i32) {
    %c0_i32 = arith.constant 0 : i32
    %c0_i32_0 = arith.constant 0 : i32
    return %arg0, %c0_i32 : i32, i32
  }
  func.func @transform_2(%arg0: i32) -> (i32, i32) {
    %c0_i32 = arith.constant 0 : i32
    %c0_i32_0 = arith.constant 0 : i32
    %c0_i32_1 = arith.constant 0 : i32
    return %c0_i32, %c0_i32_0 : i32, i32
  }
  func.func @transform_3(%arg0: i32) -> (i32, i32) {
    %c0_i32 = arith.constant 0 : i32
    %c0_i32_0 = arith.constant 0 : i32
    %c0_i32_1 = arith.constant 0 : i32
    return %c0_i32, %c0_i32_0 : i32, i32
  }
  func.func @transform_4(%arg0: i32) -> (i32, i32) {
    %c0_i32 = arith.constant 0 : i32
    %c0_i32_0 = arith.constant 0 : i32
    %c0_i32_1 = arith.constant 0 : i32
    return %c0_i32, %c0_i32_0 : i32, i32
  }
  func.func @transform_5(%arg0: i32) -> (i32, i32) {
    %c0_i32 = arith.constant 0 : i32
    %c0_i32_0 = arith.constant 0 : i32
    %c0_i32_1 = arith.constant 0 : i32
    return %c0_i32, %c0_i32_0 : i32, i32
  }
  func.func @transform_6(%arg0: i32) -> (i32, i32) {
    %c0_i32 = arith.constant 0 : i32
    %c0_i32_0 = arith.constant 0 : i32
    %c0_i32_1 = arith.constant 0 : i32
    return %c0_i32, %c0_i32_0 : i32, i32
  }
  func.func @transform_7(%arg0: i32) -> (i32, i32) {
    %c0_i32 = arith.constant 0 : i32
    %c0_i32_0 = arith.constant 0 : i32
    %c0_i32_1 = arith.constant 0 : i32
    return %c0_i32, %c0_i32_0 : i32, i32
  }
  func.func @transform_8(%arg0: i32) -> (i32, i32) {
    %c0_i32 = arith.constant 0 : i32
    %c0_i32_0 = arith.constant 0 : i32
    %c0_i32_1 = arith.constant 0 : i32
    return %c0_i32, %c0_i32_0 : i32, i32
  }
  func.func @transform_9(%arg0: i32) -> (i32, i32) {
    %c0_i32 = arith.constant 0 : i32
    %c0_i32_0 = arith.constant 0 : i32
    return %arg0, %c0_i32 : i32, i32
  }
}

</mosaic_0001>

<llo_original>
// kernel: tpu_custom_call.1
$region0: #{tpu_custom_call.1}
  #allocation0 [shape = 'u32[]', space=smem, size = 0x4, offset = 0x4, fixed_abs, tag = 'smem constant byte address 0x4 - core index']
  #allocation1 [shape = 'u32[72,128]{1,0:T(1,128)}', space=vmem, size = 0x9000, scoped, tag = 'internal scratch']
  %s0 = inlined_call_operand.hbm [shape: f32[8,128], index: 0, kind: input, shape index: {}]
  %s1 = inlined_call_operand.hbm [shape: f32[8,128], index: 1, kind: input, shape index: {}]
  %s2 = inlined_call_operand.hbm [shape: f32[1,128], index: 2, kind: input, shape index: {}]
  %s3 = inlined_call_operand.hbm [shape: f32[1,128], index: 3, kind: input, shape index: {}]
  %s4 = inlined_call_operand.hbm [shape: f32[128,256], index: 4, kind: input, shape index: {}]
  %s5 = inlined_call_operand.hbm [shape: f32[128,256], index: 5, kind: input, shape index: {}]
  %s6 = inlined_call_operand.hbm [shape: f32[128,256], index: 6, kind: input, shape index: {}]
  %s7 = inlined_call_operand.vmem [shape: f32[1,256], index: 7, kind: input, shape index: {}]
  %s8 = inlined_call_operand.vmem [shape: f32[1,256], index: 8, kind: input, shape index: {}]
  %s9 = inlined_call_operand.hbm [shape: f32[8,256], index: 9, kind: output, shape index: {}]
  %s10 = sld [smem:[#allocation0]]
  $region74: #{tpu_custom_call.1} parent=0
    _
  %s12 = ssub.s32 1, %s10
  %s13 = scalar_select 0, %s12, %s10
  $region1: #{tpu_custom_call.1} parent=0
    #allocation2 [shape = 'u8[4096]{0}', space=vmem, size = 0x1000, scoped, tag = 'input window, operand 0, single buffered']
    #allocation3 [shape = 's32[1]{0}', space=sflag, size = 0x4, scoped, tag = 'scoped memory for tpu_custom_call.1']
    #allocation4 [shape = 's32[1]{0}', space=sflag, size = 0x4, scoped, tag = 'scoped memory for tpu_custom_call.1']
    #allocation5 [shape = 'u8[4096]{0}', space=vmem, size = 0x1000, scoped, tag = 'input window, operand 1, single buffered']
    #allocation6 [shape = 's32[1]{0}', space=sflag, size = 0x4, scoped, tag = 'scoped memory for tpu_custom_call.1']
    #allocation7 [shape = 'u8[512]{0}', space=vmem, size = 0x400, scoped, tag = 'input window, operand 2, single buffered']
    #allocation8 [shape = 'u8[512]{0}', space=vmem, size = 0x400, scoped, tag = 'input window, operand 3, single buffered']
    #allocation9 [shape = 's32[1]{0}', space=sflag, size = 0x4, scoped, tag = 'scoped memory for tpu_custom_call.1']
    #allocation10 [shape = 'u8[131072]{0}', space=vmem, size = 0x20000, scoped, tag = 'input window, operand 4, single buffered']
    #allocation11 [shape = 'u8[131072]{0}', space=vmem, size = 0x20000, scoped, tag = 'input window, operand 5, single buffered']
    #allocation12 [shape = 's32[1]{0}', space=sflag, size = 0x4, scoped, tag = 'scoped memory for tpu_custom_call.1']
    #allocation13 [shape = 'u8[131072]{0}', space=vmem, size = 0x20000, scoped, tag = 'input window, operand 6, single buffered']
    #allocation14 [shape = 'u8[8192]{0}', space=vmem, size = 0x2000, scoped, tag = 'output window, operand 0, single buffered']
    %14 = vsyncpa [#allocation3], 0
    %15 = vsyncpa [#allocation6], 0
    %16 = vsyncpa [#allocation9], 0
    %17 = vsyncpa [#allocation12], 0
    %18 = vsyncpa [#allocation4], 0
    // Predicated region
    $region2: #{tpu_custom_call.1} parent=1 // pred_check
      _
    $region3: #{tpu_custom_call.1} parent=1 // pred_check_branch
      %20 = sbr.rel (0) target = $region5
    $region4: #{tpu_custom_call.1} parent=1 // pred_region
      %22 = vsyncadd [#allocation3], 0
      %s24 = sshll.u32 %s0, 4
      %s25 = int_to_ptr.hbm [resolvable:$true] %s24
      %s26 = sshll.u32 [#allocation2], 4
      %s27 = int_to_ptr.vmem [resolvable:$true] %s26
      %29 = dma.hbm_to_vmem [thread:$0]  %s25, 128, %s27, [#allocation3]
    $region5: #{tpu_custom_call.1} parent=1 // pred_fallthru
      _
    // Predicated region
    $region6: #{tpu_custom_call.1} parent=1 // pred_check
      _
    $region7: #{tpu_custom_call.1} parent=1 // pred_check_branch
      %31 = sbr.rel (0) target = $region9
    $region8: #{tpu_custom_call.1} parent=1 // pred_region
      %33 = vsyncadd [#allocation6], 0
      %s35 = sshll.u32 %s1, 4
      %s36 = int_to_ptr.hbm [resolvable:$true] %s35
      %s37 = sshll.u32 [#allocation5], 4
      %s38 = int_to_ptr.vmem [resolvable:$true] %s37
      %40 = dma.hbm_to_vmem [thread:$0]  %s36, 128, %s38, [#allocation6]
    $region9: #{tpu_custom_call.1} parent=1 // pred_fallthru
      _
    // Predicated region
    $region10: #{tpu_custom_call.1} parent=1 // pred_check
      _
    $region11: #{tpu_custom_call.1} parent=1 // pred_check_branch
      %42 = sbr.rel (0) target = $region13
    $region12: #{tpu_custom_call.1} parent=1 // pred_region
      %44 = vsyncadd [#allocation6], 0
      %s46 = sshll.u32 %s2, 4
      %s47 = int_to_ptr.hbm [resolvable:$true] %s46
      %s48 = sshll.u32 [#allocation7], 4
      %s49 = int_to_ptr.vmem [resolvable:$true] %s48
      %51 = dma.hbm_to_vmem [thread:$0]  %s47, 16, %s49, [#allocation6]
    $region13: #{tpu_custom_call.1} parent=1 // pred_fallthru
      _
    // Predicated region
    $region14: #{tpu_custom_call.1} parent=1 // pred_check
      _
    $region15: #{tpu_custom_call.1} parent=1 // pred_check_branch
      %53 = sbr.rel (0) target = $region17
    $region16: #{tpu_custom_call.1} parent=1 // pred_region
      %55 = vsyncadd [#allocation9], 0
      %s57 = sshll.u32 %s3, 4
      %s58 = int_to_ptr.hbm [resolvable:$true] %s57
      %s59 = sshll.u32 [#allocation8], 4
      %s60 = int_to_ptr.vmem [resolvable:$true] %s59
      %62 = dma.hbm_to_vmem [thread:$0]  %s58, 16, %s60, [#allocation9]
    $region17: #{tpu_custom_call.1} parent=1 // pred_fallthru
      _
    // Predicated region
    $region18: #{tpu_custom_call.1} parent=1 // pred_check
      _
    $region19: #{tpu_custom_call.1} parent=1 // pred_check_branch
      %64 = sbr.rel (0) target = $region21
    $region20: #{tpu_custom_call.1} parent=1 // pred_region
      %66 = vsyncadd [#allocation9], 0
      %s67 = sshll.u32 %s4, 4
      %s68 = int_to_ptr.hbm [resolvable:$true] %s67
      %s69 = sshll.u32 [#allocation10], 4
      %s70 = int_to_ptr.vmem [resolvable:$true] %s69
      %75 = dma.hbm_to_vmem [thread:$0]  %s68, 4096, %s70, [#allocation9], 256, 256, 16
    $region21: #{tpu_custom_call.1} parent=1 // pred_fallthru
      _
    // Predicated region
    $region22: #{tpu_custom_call.1} parent=1 // pred_check
      _
    $region23: #{tpu_custom_call.1} parent=1 // pred_check_branch
      %77 = sbr.rel (0) target = $region25
    $region24: #{tpu_custom_call.1} parent=1 // pred_region
      %79 = vsyncadd [#allocation12], 0
      %s80 = sshll.u32 %s5, 4
      %s81 = int_to_ptr.hbm [resolvable:$true] %s80
      %s82 = sshll.u32 [#allocation11], 4
      %s83 = int_to_ptr.vmem [resolvable:$true] %s82
      %88 = dma.hbm_to_vmem [thread:$0]  %s81, 4096, %s83, [#allocation12], 256, 256, 16
    $region25: #{tpu_custom_call.1} parent=1 // pred_fallthru
      _
    // Predicated region
    $region26: #{tpu_custom_call.1} parent=1 // pred_check
      _
    $region27: #{tpu_custom_call.1} parent=1 // pred_check_branch
      %90 = sbr.rel (0) target = $region29
    $region28: #{tpu_custom_call.1} parent=1 // pred_region
      %92 = vsyncadd [#allocation12], 0
      %s93 = sshll.u32 %s6, 4
      %s94 = int_to_ptr.hbm [resolvable:$true] %s93
      %s95 = sshll.u32 [#allocation13], 4
      %s96 = int_to_ptr.vmem [resolvable:$true] %s95
      %101 = dma.hbm_to_vmem [thread:$0]  %s94, 4096, %s96, [#allocation12], 256, 256, 16
    $region29: #{tpu_custom_call.1} parent=1 // pred_fallthru
      _
    // Predicated region
    $region30: #{tpu_custom_call.1} parent=1 // pred_check
      _
    $region31: #{tpu_custom_call.1} parent=1 // pred_check_branch
      %103 = sbr.rel (0) target = $region33
    $region32: #{tpu_custom_call.1} parent=1 // pred_region
      _
    $region33: #{tpu_custom_call.1} parent=1 // pred_fallthru
      _
    // Predicated region
    $region34: #{tpu_custom_call.1} parent=1 // pred_check
      _
    $region35: #{tpu_custom_call.1} parent=1 // pred_check_branch
      %105 = sbr.rel (0) target = $region37
    $region36: #{tpu_custom_call.1} parent=1 // pred_region
      _
    $region37: #{tpu_custom_call.1} parent=1 // pred_fallthru
      _
    // Predicated region
    $region38: #{tpu_custom_call.1} parent=1 // pred_check
      _
    $region39: #{tpu_custom_call.1} parent=1 // pred_check_branch
      %107 = sbr.rel (0) target = $region41
    $region40: #{tpu_custom_call.1} parent=1 // pred_region
      %109 = dma.done [#allocation3], 128
    $region41: #{tpu_custom_call.1} parent=1 // pred_fallthru
      _
    // Predicated region
    $region42: #{tpu_custom_call.1} parent=1 // pred_check
      _
    $region43: #{tpu_custom_call.1} parent=1 // pred_check_branch
      %111 = sbr.rel (0) target = $region45
    $region44: #{tpu_custom_call.1} parent=1 // pred_region
      %113 = dma.done [#allocation6], 128
    $region45: #{tpu_custom_call.1} parent=1 // pred_fallthru
      _
    // Predicated region
    $region46: #{tpu_custom_call.1} parent=1 // pred_check
      _
    $region47: #{tpu_custom_call.1} parent=1 // pred_check_branch
      %115 = sbr.rel (0) target = $region49
    $region48: #{tpu_custom_call.1} parent=1 // pred_region
      %117 = dma.done [#allocation6], 16
    $region49: #{tpu_custom_call.1} parent=1 // pred_fallthru
      _
    // Predicated region
    $region50: #{tpu_custom_call.1} parent=1 // pred_check
      _
    $region51: #{tpu_custom_call.1} parent=1 // pred_check_branch
      %119 = sbr.rel (0) target = $region53
    $region52: #{tpu_custom_call.1} parent=1 // pred_region
      %121 = dma.done [#allocation9], 16
    $region53: #{tpu_custom_call.1} parent=1 // pred_fallthru
      _
    // Predicated region
    $region54: #{tpu_custom_call.1} parent=1 // pred_check
      _
    $region55: #{tpu_custom_call.1} parent=1 // pred_check_branch
      %123 = sbr.rel (0) target = $region57
    $region56: #{tpu_custom_call.1} parent=1 // pred_region
      %125 = dma.done [#allocation9], 4096
    $region57: #{tpu_custom_call.1} parent=1 // pred_fallthru
      _
    // Predicated region
    $region58: #{tpu_custom_call.1} parent=1 // pred_check
      _
    $region59: #{tpu_custom_call.1} parent=1 // pred_check_branch
      %127 = sbr.rel (0) target = $region61
    $region60: #{tpu_custom_call.1} parent=1 // pred_region
      %129 = dma.done [#allocation12], 4096
    $region61: #{tpu_custom_call.1} parent=1 // pred_fallthru
      _
    // Predicated region
    $region62: #{tpu_custom_call.1} parent=1 // pred_check
      _
    $region63: #{tpu_custom_call.1} parent=1 // pred_check_branch
      %131 = sbr.rel (0) target = $region65
    $region64: #{tpu_custom_call.1} parent=1 // pred_region
      %133 = dma.done [#allocation12], 4096
    $region65: #{tpu_custom_call.1} parent=1 // pred_fallthru
      _
    %v134 = vld [vmem:[#allocation2] sm:$0xff]
    %v135 = vld [vmem:[#allocation5] sm:$0xff]
    %v136 = vld [vmem:[#allocation7] sm:$0x1]
    %v137 = vld [vmem:[#allocation8] sm:$0x1]
    %138 = vadd.xlane.f32.xlu0 %v135
    %v139 = vpop.xlane.xlu0 %138
    %v140 = vrcp.pop 128.0
    %v141 = vmul.f32 128.0, %v140
    %v142 = vsub.f32 1.0, %v141
    %v143 = vmul.f32 %v140, %v142
    %v144 = vadd.f32 %v140, %v143
    %vm145 = vweird.f32 %v140
    %v146 = vsel %vm145, %v140, %v144
    %v147 = vmul.f32 %v139, %v146
    %v148 = vsub.f32 %v135, %v147
    %v149 = vmul.f32 %v148, %v148
    %150 = vadd.xlane.f32.xlu0 %v149
    %v151 = vpop.xlane.xlu0 %150
    %v152 = vmul.f32 %v151, %v146
    %v153 = vadd.f32 %v152, 1e-05
    %v154 = vrsqrt.pop %v153
    %v155 = vmul.f32 %v154, %v153
    %v156 = vmul.f32 %v155, %v154
    %v157 = vmul.f32 0.5, %v156
    %v158 = vsub.f32 1.5, %v157
    %v159 = vmul.f32 %v154, %v158
    %vm160 = vweird.f32 %v153
    %vm161 = vweird.f32 %v154
    %vm162 = vmor %vm160, %vm161
    %v163 = vsel %vm162, %v154, %v159
    %v164 = vmul.f32 %v148, %v163
    %v166 = vperm.slane %v136, 0
    %v168 = vmul.f32 %v164, %v166
    %v170 = vperm.slane %v137, 0
    %v172 = vadd.f32 %v168, %v170
    %173 = vadd.xlane.f32.xlu0 %v134
    %v174 = vpop.xlane.xlu0 %173
    %v175 = vmul.f32 %v174, %v146
    %v176 = vsub.f32 %v134, %v175
    %v177 = vmul.f32 %v176, %v176
    %178 = vadd.xlane.f32.xlu0 %v177
    %v179 = vpop.xlane.xlu0 %178
    %v180 = vmul.f32 %v179, %v146
    %v181 = vadd.f32 %v180, 1e-05
    %v182 = vrsqrt.pop %v181
    %v183 = vmul.f32 %v182, %v181
    %v184 = vmul.f32 %v183, %v182
    %v185 = vmul.f32 0.5, %v184
    %v186 = vsub.f32 1.5, %v185
    %v187 = vmul.f32 %v182, %v186
    %vm188 = vweird.f32 %v181
    %vm189 = vweird.f32 %v182
    %vm190 = vmor %vm188, %vm189
    %v191 = vsel %vm190, %v182, %v187
    %v192 = vmul.f32 %v176, %v191
    %v193 = vmul.f32 %v192, %v166
    %v194 = vadd.f32 %v193, %v170
    %v195 = vld [vmem:[#allocation10] sm:$0xff]
    %v196 = vld [vmem:[#allocation10 + $0x8] sm:$0xff]
    %v197 = vld [vmem:[#allocation10 + $0x10] sm:$0xff]
    %v198 = vld [vmem:[#allocation10 + $0x18] sm:$0xff]
    %v199 = vld [vmem:[#allocation10 + $0x20] sm:$0xff]
    %v200 = vld [vmem:[#allocation10 + $0x28] sm:$0xff]
    %v201 = vld [vmem:[#allocation10 + $0x30] sm:$0xff]
    %v202 = vld [vmem:[#allocation10 + $0x38] sm:$0xff]
    %v203 = vld [vmem:[#allocation10 + $0x40] sm:$0xff]
    %v204 = vld [vmem:[#allocation10 + $0x48] sm:$0xff]
    %v205 = vld [vmem:[#allocation10 + $0x50] sm:$0xff]
    %v206 = vld [vmem:[#allocation10 + $0x58] sm:$0xff]
    %v207 = vld [vmem:[#allocation10 + $0x60] sm:$0xff]
    %v208 = vld [vmem:[#allocation10 + $0x68] sm:$0xff]
    %v209 = vld [vmem:[#allocation10 + $0x70] sm:$0xff]
    %v210 = vld [vmem:[#allocation10 + $0x78] sm:$0xff]
    %v211 = vld [vmem:[#allocation10 + $0x80] sm:$0xff]
    %v212 = vld [vmem:[#allocation10 + $0x88] sm:$0xff]
    %v213 = vld [vmem:[#allocation10 + $0x90] sm:$0xff]
    %v214 = vld [vmem:[#allocation10 + $0x98] sm:$0xff]
    %v215 = vld [vmem:[#allocation10 + $0xa0] sm:$0xff]
    %v216 = vld [vmem:[#allocation10 + $0xa8] sm:$0xff]
    %v217 = vld [vmem:[#allocation10 + $0xb0] sm:$0xff]
    %v218 = vld [vmem:[#allocation10 + $0xb8] sm:$0xff]
    %v219 = vld [vmem:[#allocation10 + $0xc0] sm:$0xff]
    %v220 = vld [vmem:[#allocation10 + $0xc8] sm:$0xff]
    %v221 = vld [vmem:[#allocation10 + $0xd0] sm:$0xff]
    %v222 = vld [vmem:[#allocation10 + $0xd8] sm:$0xff]
    %v223 = vld [vmem:[#allocation10 + $0xe0] sm:$0xff]
    %v224 = vld [vmem:[#allocation10 + $0xe8] sm:$0xff]
    %v225 = vld [vmem:[#allocation10 + $0xf0] sm:$0xff]
    %v226 = vld [vmem:[#allocation10 + $0xf8] sm:$0xff]
    %227 = vmatpush.msra.mxu0 %v225
    %228 = vmatpush.msra.mxu0 %v223
    %229 = vmatpush.msra.mxu0 %v221
    %230 = vmatpush.msra.mxu0 %v219
    %231 = vmatpush.msra.mxu0 %v217
    %232 = vmatpush.msra.mxu0 %v215
    %233 = vmatpush.msra.mxu0 %v213
    %234 = vmatpush.msra.mxu0 %v211
    %235 = vmatpush.msra.mxu0 %v209
    %236 = vmatpush.msra.mxu0 %v207
    %237 = vmatpush.msra.mxu0 %v205
    %238 = vmatpush.msra.mxu0 %v203
    %239 = vmatpush.msra.mxu0 %v201
    %240 = vmatpush.msra.mxu0 %v199
    %241 = vmatpush.msra.mxu0 %v197
    %242 = vmatpush.msra.mxu0 %v195
    %243 = vmatmul.f32.gmra.mxu0 %v172
    %v244 = vpop.f32.mrf.mxu0
    %v245 = vadd.f32 0.0, %v244
    %246 = vdwg.mxu0
    %247 = vmatpush.msra.mxu0 %v226
    %248 = vmatpush.msra.mxu0 %v224
    %249 = vmatpush.msra.mxu0 %v222
    %250 = vmatpush.msra.mxu0 %v220
    %251 = vmatpush.msra.mxu0 %v218
    %252 = vmatpush.msra.mxu0 %v216
    %253 = vmatpush.msra.mxu0 %v214
    %254 = vmatpush.msra.mxu0 %v212
    %255 = vmatpush.msra.mxu0 %v210
    %256 = vmatpush.msra.mxu0 %v208
    %257 = vmatpush.msra.mxu0 %v206
    %258 = vmatpush.msra.mxu0 %v204
    %259 = vmatpush.msra.mxu0 %v202
    %260 = vmatpush.msra.mxu0 %v200
    %261 = vmatpush.msra.mxu0 %v198
    %262 = vmatpush.msra.mxu0 %v196
    %263 = vmatmul.f32.gmra.mxu0 %v172
    %v264 = vpop.f32.mrf.mxu0
    %v265 = vadd.f32 0.0, %v264
    %266 = vdwg.mxu0
    %v267 = vmul.f32 %v245, %v194
    %v268 = vadd.f32 %v267, %v265
    %v269 = vmul.f32 %v172, 0.5
    %v270 = vmul.f32 %v172, 0.70710677
    %v271 = vmul.f32 %v270, %v270
    %v272 = vmin.f32 16.0, %v271
    %v273 = vmul.f32 %v272, 2.1237322e-06
    %v274 = vadd.f32 %v273, 0.00028619796
    %v275 = vmul.f32 %v272, %v274
    %v276 = vadd.f32 %v275, 0.0036580483
    %v277 = vmul.f32 %v272, %v276
    %v278 = vadd.f32 %v277, 0.05243302
    %v279 = vmul.f32 %v272, %v278
    %v280 = vadd.f32 %v279, 0.18741608
    %v281 = vmul.f32 %v272, %v280
    %v282 = vadd.f32 %v281, 1.1283791
    %v283 = vmul.f32 %v270, %v282
    %v284 = vmul.f32 %v272, 3.8918573e-05
    %v285 = vadd.f32 %v284, 0.001143296
    %v286 = vmul.f32 %v272, %v285
    %v287 = vadd.f32 %v286, 0.014752088
    %v288 = vmul.f32 %v272, %v287
    %v289 = vadd.f32 %v288, 0.112945676
    %v290 = vmul.f32 %v272, %v289
    %v291 = vadd.f32 %v290, 0.4994258
    %v292 = vmul.f32 %v272, %v291
    %v293 = vadd.f32 %v292, 1.0
    %v294 = vrcp.pop %v293
    %v295 = vmul.f32 %v293, %v294
    %v296 = vsub.f32 1.0, %v295
    %v297 = vmul.f32 %v294, %v296
    %v298 = vadd.f32 %v294, %v297
    %vm299 = vweird.f32 %v293
    %vm300 = vweird.f32 %v294
    %vm301 = vmor %vm299, %vm300
    %v302 = vsel %vm301, %v294, %v298
    %v303 = vand.u32 2147483647, %v293
    %vm304 = vcmp.eq.f32.partialorder %v303, 8.507059e+37
    %v305 = vand.u32 %v293, 2147483648
    %v306 = vor.u32 1.1754944e-38, %v305
    %v307 = vsel %vm304, %v306, %v302
    %v308 = vmul.f32 %v283, %v307
    %v309 = vmin.f32 %v308, 1.0
    %v310 = vmax.f32 %v309, -1.0
    %v311 = vadd.f32 %v310, 1.0
    %v312 = vmul.f32 %v269, %v311
    %v313 = vmul.f32 %v268, 0.5
    %v314 = vmul.f32 %v268, 0.70710677
    %v315 = vmul.f32 %v314, %v314
    %v316 = vmin.f32 16.0, %v315
    %v317 = vmul.f32 %v316, 2.1237322e-06
    %v318 = vadd.f32 %v317, 0.00028619796
    %v319 = vmul.f32 %v316, %v318
    %v320 = vadd.f32 %v319, 0.0036580483
    %v321 = vmul.f32 %v316, %v320
    %v322 = vadd.f32 %v321, 0.05243302
    %v323 = vmul.f32 %v316, %v322
    %v324 = vadd.f32 %v323, 0.18741608
    %v325 = vmul.f32 %v316, %v324
    %v326 = vadd.f32 %v325, 1.1283791
    %v327 = vmul.f32 %v314, %v326
    %v328 = vmul.f32 %v316, 3.8918573e-05
    %v329 = vadd.f32 %v328, 0.001143296
    %v330 = vmul.f32 %v316, %v329
    %v331 = vadd.f32 %v330, 0.014752088
    %v332 = vmul.f32 %v316, %v331
    %v333 = vadd.f32 %v332, 0.112945676
    %v334 = vmul.f32 %v316, %v333
    %v335 = vadd.f32 %v334, 0.4994258
    %v336 = vmul.f32 %v316, %v335
    %v337 = vadd.f32 %v336, 1.0
    %v338 = vrcp.pop %v337
    %v339 = vmul.f32 %v337, %v338
    %v340 = vsub.f32 1.0, %v339
    %v341 = vmul.f32 %v338, %v340
    %v342 = vadd.f32 %v338, %v341
    %vm343 = vweird.f32 %v337
    %vm344 = vweird.f32 %v338
    %vm345 = vmor %vm343, %vm344
    %v346 = vsel %vm345, %v338, %v342
    %v347 = vand.u32 2147483647, %v337
    %vm348 = vcmp.eq.f32.partialorder %v347, 8.507059e+37
    %v349 = vand.u32 %v337, 2147483648
    %v350 = vor.u32 1.1754944e-38, %v349
    %v351 = vsel %vm348, %v350, %v346
    %v352 = vmul.f32 %v327, %v351
    %v353 = vmin.f32 %v352, 1.0
    %v354 = vmax.f32 %v353, -1.0
    %v355 = vadd.f32 %v354, 1.0
    %v356 = vmul.f32 %v313, %v355
    %v357 = vld [vmem:[#allocation11] sm:$0xff]
    %v358 = vld [vmem:[#allocation11 + $0x8] sm:$0xff]
    %v359 = vld [vmem:[#allocation11 + $0x10] sm:$0xff]
    %v360 = vld [vmem:[#allocation11 + $0x18] sm:$0xff]
    %v361 = vld [vmem:[#allocation11 + $0x20] sm:$0xff]
    %v362 = vld [vmem:[#allocation11 + $0x28] sm:$0xff]
    %v363 = vld [vmem:[#allocation11 + $0x30] sm:$0xff]
    %v364 = vld [vmem:[#allocation11 + $0x38] sm:$0xff]
    %v365 = vld [vmem:[#allocation11 + $0x40] sm:$0xff]
    %v366 = vld [vmem:[#allocation11 + $0x48] sm:$0xff]
    %v367 = vld [vmem:[#allocation11 + $0x50] sm:$0xff]
    %v368 = vld [vmem:[#allocation11 + $0x58] sm:$0xff]
    %v369 = vld [vmem:[#allocation11 + $0x60] sm:$0xff]
    %v370 = vld [vmem:[#allocation11 + $0x68] sm:$0xff]
    %v371 = vld [vmem:[#allocation11 + $0x70] sm:$0xff]
    %v372 = vld [vmem:[#allocation11 + $0x78] sm:$0xff]
    %v373 = vld [vmem:[#allocation11 + $0x80] sm:$0xff]
    %v374 = vld [vmem:[#allocation11 + $0x88] sm:$0xff]
    %v375 = vld [vmem:[#allocation11 + $0x90] sm:$0xff]
    %v376 = vld [vmem:[#allocation11 + $0x98] sm:$0xff]
    %v377 = vld [vmem:[#allocation11 + $0xa0] sm:$0xff]
    %v378 = vld [vmem:[#allocation11 + $0xa8] sm:$0xff]
    %v379 = vld [vmem:[#allocation11 + $0xb0] sm:$0xff]
    %v380 = vld [vmem:[#allocation11 + $0xb8] sm:$0xff]
    %v381 = vld [vmem:[#allocation11 + $0xc0] sm:$0xff]
    %v382 = vld [vmem:[#allocation11 + $0xc8] sm:$0xff]
    %v383 = vld [vmem:[#allocation11 + $0xd0] sm:$0xff]
    %v384 = vld [vmem:[#allocation11 + $0xd8] sm:$0xff]
    %v385 = vld [vmem:[#allocation11 + $0xe0] sm:$0xff]
    %v386 = vld [vmem:[#allocation11 + $0xe8] sm:$0xff]
    %v387 = vld [vmem:[#allocation11 + $0xf0] sm:$0xff]
    %v388 = vld [vmem:[#allocation11 + $0xf8] sm:$0xff]
    %v389 = vld [vmem:[#allocation13] sm:$0xff]
    %v390 = vld [vmem:[#allocation13 + $0x8] sm:$0xff]
    %v391 = vld [vmem:[#allocation13 + $0x10] sm:$0xff]
    %v392 = vld [vmem:[#allocation13 + $0x18] sm:$0xff]
    %v393 = vld [vmem:[#allocation13 + $0x20] sm:$0xff]
    %v394 = vld [vmem:[#allocation13 + $0x28] sm:$0xff]
    %v395 = vld [vmem:[#allocation13 + $0x30] sm:$0xff]
    %v396 = vld [vmem:[#allocation13 + $0x38] sm:$0xff]
    %v397 = vld [vmem:[#allocation13 + $0x40] sm:$0xff]
    %v398 = vld [vmem:[#allocation13 + $0x48] sm:$0xff]
    %v399 = vld [vmem:[#allocation13 + $0x50] sm:$0xff]
    %v400 = vld [vmem:[#allocation13 + $0x58] sm:$0xff]
    %v401 = vld [vmem:[#allocation13 + $0x60] sm:$0xff]
    %v402 = vld [vmem:[#allocation13 + $0x68] sm:$0xff]
    %v403 = vld [vmem:[#allocation13 + $0x70] sm:$0xff]
    %v404 = vld [vmem:[#allocation13 + $0x78] sm:$0xff]
    %v405 = vld [vmem:[#allocation13 + $0x80] sm:$0xff]
    %v406 = vld [vmem:[#allocation13 + $0x88] sm:$0xff]
    %v407 = vld [vmem:[#allocation13 + $0x90] sm:$0xff]
    %v408 = vld [vmem:[#allocation13 + $0x98] sm:$0xff]
    %v409 = vld [vmem:[#allocation13 + $0xa0] sm:$0xff]
    %v410 = vld [vmem:[#allocation13 + $0xa8] sm:$0xff]
    %v411 = vld [vmem:[#allocation13 + $0xb0] sm:$0xff]
    %v412 = vld [vmem:[#allocation13 + $0xb8] sm:$0xff]
    %v413 = vld [vmem:[#allocation13 + $0xc0] sm:$0xff]
    %v414 = vld [vmem:[#allocation13 + $0xc8] sm:$0xff]
    %v415 = vld [vmem:[#allocation13 + $0xd0] sm:$0xff]
    %v416 = vld [vmem:[#allocation13 + $0xd8] sm:$0xff]
    %v417 = vld [vmem:[#allocation13 + $0xe0] sm:$0xff]
    %v418 = vld [vmem:[#allocation13 + $0xe8] sm:$0xff]
    %v419 = vld [vmem:[#allocation13 + $0xf0] sm:$0xff]
    %v420 = vld [vmem:[#allocation13 + $0xf8] sm:$0xff]
    %421 = vmatpush.msra.mxu0 %v419
    %422 = vmatpush.msra.mxu0 %v417
    %423 = vmatpush.msra.mxu0 %v415
    %424 = vmatpush.msra.mxu0 %v413
    %425 = vmatpush.msra.mxu0 %v411
    %426 = vmatpush.msra.mxu0 %v409
    %427 = vmatpush.msra.mxu0 %v407
    %428 = vmatpush.msra.mxu0 %v405
    %429 = vmatpush.msra.mxu0 %v403
    %430 = vmatpush.msra.mxu0 %v401
    %431 = vmatpush.msra.mxu0 %v399
    %432 = vmatpush.msra.mxu0 %v397
    %433 = vmatpush.msra.mxu0 %v395
    %434 = vmatpush.msra.mxu0 %v393
    %435 = vmatpush.msra.mxu0 %v391
    %436 = vmatpush.msra.mxu0 %v389
    %437 = vmatmul.f32.gmra.mxu0 %v356
    %v438 = vpop.f32.mrf.mxu0
    %v439 = vadd.f32 0.0, %v438
    %440 = vdwg.mxu0
    %441 = vmatpush.msra.mxu0 %v420
    %442 = vmatpush.msra.mxu0 %v418
    %443 = vmatpush.msra.mxu0 %v416
    %444 = vmatpush.msra.mxu0 %v414
    %445 = vmatpush.msra.mxu0 %v412
    %446 = vmatpush.msra.mxu0 %v410
    %447 = vmatpush.msra.mxu0 %v408
    %448 = vmatpush.msra.mxu0 %v406
    %449 = vmatpush.msra.mxu0 %v404
    %450 = vmatpush.msra.mxu0 %v402
    %451 = vmatpush.msra.mxu0 %v400
    %452 = vmatpush.msra.mxu0 %v398
    %453 = vmatpush.msra.mxu0 %v396
    %454 = vmatpush.msra.mxu0 %v394
    %455 = vmatpush.msra.mxu0 %v392
    %456 = vmatpush.msra.mxu0 %v390
    %457 = vmatmul.f32.gmra.mxu0 %v356
    %v458 = vpop.f32.mrf.mxu0
    %v459 = vadd.f32 0.0, %v458
    %460 = vdwg.mxu0
    %461 = vmatpush.msra.mxu0 %v387
    %462 = vmatpush.msra.mxu0 %v385
    %463 = vmatpush.msra.mxu0 %v383
    %464 = vmatpush.msra.mxu0 %v381
    %465 = vmatpush.msra.mxu0 %v379
    %466 = vmatpush.msra.mxu0 %v377
    %467 = vmatpush.msra.mxu0 %v375
    %468 = vmatpush.msra.mxu0 %v373
    %469 = vmatpush.msra.mxu0 %v371
    %470 = vmatpush.msra.mxu0 %v369
    %471 = vmatpush.msra.mxu0 %v367
    %472 = vmatpush.msra.mxu0 %v365
    %473 = vmatpush.msra.mxu0 %v363
    %474 = vmatpush.msra.mxu0 %v361
    %475 = vmatpush.msra.mxu0 %v359
    %476 = vmatpush.msra.mxu0 %v357
    %477 = vmatmul.f32.gmra.mxu0 %v312
    %v478 = vpop.f32.mrf.mxu0
    %v479 = vadd.f32 %v439, %v478
    %480 = vdwg.mxu0
    %481 = vmatpush.msra.mxu0 %v388
    %482 = vmatpush.msra.mxu0 %v386
    %483 = vmatpush.msra.mxu0 %v384
    %484 = vmatpush.msra.mxu0 %v382
    %485 = vmatpush.msra.mxu0 %v380
    %486 = vmatpush.msra.mxu0 %v378
    %487 = vmatpush.msra.mxu0 %v376
    %488 = vmatpush.msra.mxu0 %v374
    %489 = vmatpush.msra.mxu0 %v372
    %490 = vmatpush.msra.mxu0 %v370
    %491 = vmatpush.msra.mxu0 %v368
    %492 = vmatpush.msra.mxu0 %v366
    %493 = vmatpush.msra.mxu0 %v364
    %494 = vmatpush.msra.mxu0 %v362
    %495 = vmatpush.msra.mxu0 %v360
    %496 = vmatpush.msra.mxu0 %v358
    %497 = vmatmul.f32.gmra.mxu0 %v312
    %v498 = vpop.f32.mrf.mxu0
    %v499 = vadd.f32 %v459, %v498
    %500 = vdwg.mxu0
    %v501 = vld [vmem:[%s7] sm:$0x3]
    %v502 = vld [vmem:[%s8] sm:$0x3]
    %v503 = vadd.f32 %v479, %v499
    %504 = vadd.xlane.f32.xlu0 %v503
    %v505 = vpop.xlane.xlu0 %504
    %v506 = vrcp.pop 256.0
    %v507 = vmul.f32 256.0, %v506
    %v508 = vsub.f32 1.0, %v507
    %v509 = vmul.f32 %v506, %v508
    %v510 = vadd.f32 %v506, %v509
    %vm511 = vweird.f32 %v506
    %v512 = vsel %vm511, %v506, %v510
    %v513 = vmul.f32 %v505, %v512
    %v514 = vsub.f32 %v479, %v513
    %v515 = vsub.f32 %v499, %v513
    %v516 = vmul.f32 %v514, %v514
    %v517 = vmul.f32 %v515, %v515
    %v518 = vadd.f32 %v516, %v517
    %519 = vadd.xlane.f32.xlu0 %v518
    %v520 = vpop.xlane.xlu0 %519
    %v521 = vmul.f32 %v520, %v512
    %v522 = vadd.f32 %v521, 1e-05
    %v523 = vrsqrt.pop %v522
    %v524 = vmul.f32 %v523, %v522
    %v525 = vmul.f32 %v524, %v523
    %v526 = vmul.f32 0.5, %v525
    %v527 = vsub.f32 1.5, %v526
    %v528 = vmul.f32 %v523, %v527
    %vm529 = vweird.f32 %v522
    %vm530 = vweird.f32 %v523
    %vm531 = vmor %vm529, %vm530
    %v532 = vsel %vm531, %v523, %v528
    %v533 = vmul.f32 %v514, %v532
    %v534 = vmul.f32 %v515, %v532
    %v536 = vperm.slane %v501, 0
    %v537 = vperm.slane %v501, 1
    %v540 = vmul.f32 %v533, %v536
    %v541 = vmul.f32 %v534, %v537
    %v543 = vperm.slane %v502, 0
    %v544 = vperm.slane %v502, 1
    %v547 = vadd.f32 %v540, %v543
    %v548 = vadd.f32 %v541, %v544
    %549 = vst [vmem:[#allocation14] sm:$0xff] %v547
    %550 = vst [vmem:[#allocation14 + $0x8] sm:$0xff] %v548
    // Predicated region
    $region66: #{tpu_custom_call.1} parent=1 // pred_check
      _
    $region67: #{tpu_custom_call.1} parent=1 // pred_check_branch
      %552 = sbr.rel (0) target = $region69
    $region68: #{tpu_custom_call.1} parent=1 // pred_region
      %554 = vsyncadd [#allocation4], 0
      %s556 = sshll.u32 [#allocation14], 4
      %s557 = int_to_ptr.vmem [resolvable:$true] %s556
      %s558 = sshll.u32 %s9, 4
      %s559 = int_to_ptr.hbm [resolvable:$true] %s558
      %561 = dma.vmem_to_hbm [thread:$0]  %s557, 256, %s559, [#allocation4]
    $region69: #{tpu_custom_call.1} parent=1 // pred_fallthru
      _
    // Predicated region
    $region70: #{tpu_custom_call.1} parent=1 // pred_check
      _
    $region71: #{tpu_custom_call.1} parent=1 // pred_check_branch
      %563 = sbr.rel (0) target = $region73
    $region72: #{tpu_custom_call.1} parent=1 // pred_region
      %565 = dma.done [#allocation4], 256
    $region73: #{tpu_custom_call.1} parent=1 // pred_fallthru
      _
    %566 = vsyncpa [#allocation3], 1
    %567 = vsyncpa [#allocation6], 1
    %568 = vsyncpa [#allocation9], 1
    %569 = vsyncpa [#allocation12], 1
    %570 = vsyncpa [#allocation4], 1

</llo_original>
